<compile_context>
chip_gen: v5e
topology: v5e:2x2
jax: 0.10.0
libtpu: 0.0.40
codegen_flags: <defaults>
</compile_context>

<pallas_src>
import functools

import jax
import jax.numpy as jnp
from jax.experimental import pallas as pl
from jax.experimental.pallas import tpu as pltpu

DROPOUT_P = 0.4
_KEEP_SCALE = 1.0 / (1.0 - DROPOUT_P)
# keep iff bits >= P * 2^32  ->  P(keep) = 1 - P  (integer compare, no
# uint->float convert / multiply on the VPU)
_DROP_THRESH = int(DROPOUT_P * (1 << 32))

LANE = 128
_TILE_BUDGET_BYTES = 16 * 1024 * 1024   # per hidden-state buffer (x2 for dbl-buf)
_VMEM_LIMIT_BYTES = 48 * 1024 * 1024    # safe on v7x (64 MiB) and v5e/v6e


def _head_kernel(hs_ref, w_ref, b_ref, bits_ref, o_ref, acc_ref, *, training):
    """hs_ref: [tb, ts, H] (bf16); w_ref: [H, LPAD] f32 (1/S pre-folded);
    b_ref: [1, LPAD] f32; bits_ref: [tb, H] uint32; o_ref: [tb, LPAD] f32;
    acc_ref: [tb, H] f32 scratch (partial sums over the sequence)."""
    k = pl.program_id(1)

    @pl.when(k == 0)
    def _():
        acc_ref[...] = jnp.zeros_like(acc_ref)

    # Streaming partial sum over this sequence tile; upcast only the tile.
    acc_ref[...] += jnp.sum(hs_ref[...].astype(jnp.float32), axis=1)

    @pl.when(k == pl.num_programs(1) - 1)
    def _():
        pooled = acc_ref[...]                         # sum over S (1/S is in W)
        if training:
            keep = bits_ref[...] >= jnp.uint32(_DROP_THRESH)
            pooled = jnp.where(keep, pooled * _KEEP_SCALE, 0.0)
        logits = jnp.dot(pooled, w_ref[...], preferred_element_type=jnp.float32)
        logits = logits + b_ref[...]
        o_ref[...] = logits.astype(o_ref.dtype)


def _batch_tile(bp):
    """bp is a multiple of 8. Pick a tile up to 64 that keeps >=2 batch grid
    steps whenever bp >= 16 (so both v7x TensorCores get work)."""
    if bp <= 8:
        return bp
    tb = min(64, (bp // 2 // 8) * 8)
    tb = max(tb, 8)
    while bp % tb:
        tb -= 8
    return tb


def _seq_tile(S, tb, H, itemsize, *, align):
    """Seq tile (multiple of `align` or the full axis) such that one hidden
    tile stays within the per-buffer budget. Returns (ts, padded_S)."""
    bytes_per_row = max(1, tb * H * itemsize)
    max_rows = max(align, _TILE_BUDGET_BYTES // bytes_per_row)
    if S <= max_rows:
        return S, S                       # full axis in one step (always legal)
    ts = max(align, (max_rows // align) * align)
    padded_S = ((S + ts - 1) // ts) * ts  # zero-pad S; zeros don't change sum
    return ts, padded_S


def xlnet_classifier_head(hidden_states, w, b, bits, *, training=False):
    """hidden_states: [B, S, H] (bf16 or f32); w: [H, L]; b: [L] or [1, L];
    bits: [B, H] uint32. Returns logits [B, L] f32."""
    B, S, H = hidden_states.shape
    L = w.shape[1]

    # Lane-dense classifier output: pad labels up to a multiple of 128.
    # Pre-padded, f32, with 1/S folded in (zero-cost micro-opt: removes the
    # in-kernel astype + per-epilogue (tb,H) multiply).
    lpad = max(LANE, ((L + LANE - 1) // LANE) * LANE)
    w_pad = jnp.pad(w.astype(jnp.float32), ((0, 0), (0, lpad - L))) * (1.0 / S)
    b_pad = jnp.pad(b.reshape(1, -1).astype(jnp.float32), ((0, 0), (0, lpad - L)))

    # Batch: pad to a multiple of 8 so the "parallel" axis always has legal,
    # shardable tiles (>=2 steps when padded B >= 16).
    bp = ((B + 7) // 8) * 8
    tb = _batch_tile(bp)

    # Sequence: tile alignment 16 for bf16 sublane packing, 8 otherwise.
    align = 16 if hidden_states.dtype == jnp.bfloat16 else 8
    ts, sp = _seq_tile(S, tb, H, hidden_states.dtype.itemsize, align=align)

    if bp != B or sp != S:
        hidden_states = jnp.pad(hidden_states, ((0, bp - B), (0, sp - S), (0, 0)))
    if bp != B:
        bits = jnp.pad(bits, ((0, bp - B), (0, 0)))

    grid = (bp // tb, sp // ts)
    kernel = functools.partial(_head_kernel, training=training)

    out = pl.pallas_call(
        kernel,
        out_shape=jax.ShapeDtypeStruct((bp, lpad), jnp.float32),
        grid_spec=pltpu.PrefetchScalarGridSpec(
            num_scalar_prefetch=0,
            grid=grid,
            in_specs=[
                pl.BlockSpec((tb, ts, H), lambda i, k: (i, k, 0)),   # hidden
                pl.BlockSpec((H, lpad), lambda i, k: (0, 0)),        # W (padded, /S)
                pl.BlockSpec((1, lpad), lambda i, k: (0, 0)),        # b (padded)
                pl.BlockSpec((tb, H), lambda i, k: (i, 0)),          # dropout bits
            ],
            out_specs=pl.BlockSpec((tb, lpad), lambda i, k: (i, 0)),
            scratch_shapes=[pltpu.VMEM((tb, H), jnp.float32)],
        ),
        compiler_params=pltpu.CompilerParams(
            dimension_semantics=("parallel", "arbitrary"),
            vmem_limit_bytes=_VMEM_LIMIT_BYTES,
        ),
    )(hidden_states, w_pad, b_pad, bits)
    return out[:B, :L]


def forward(input_ids, attention_mask, params, rng, *, training=False):
    """Mirrors XLNetWithDropout.forward -> {'logits': ...}."""
    # ---- backbone stub (plain JAX glue): embedding lookup -> [B, S, H] -----
    # attention_mask would be consumed inside the real XLNet backbone; the
    # head (like the PyTorch code) does not use it for pooling.
    # TODO(synk): fuse this gather into the kernel once the real backbone
    # (which produces last_hidden_state) is available.
    # Hidden states stored bf16 in HBM (halves the dominant streaming traffic);
    # the kernel accumulates in f32.
    hidden_states = jnp.take(params["embedding"], input_ids, axis=0).astype(jnp.bfloat16)
    B = input_ids.shape[0]
    H = hidden_states.shape[-1]
    # Dropout randomness: uint32 bits consumed in-kernel (integer keep test).
    bits = jax.random.bits(rng, (B, H), dtype=jnp.uint32)
    # ---- Pallas hot path: mean-pool + dropout + linear classifier ----------
    logits = xlnet_classifier_head(
        hidden_states, params["classifier_w"], params["classifier_b"], bits,
        training=training)
    return {"logits": logits}


if __name__ == "__main__":
    # Small shapes consistent with the module: batch=2, seq=8, hidden=32, labels=4
    B, S, H, L, VOCAB = 2, 8, 32, 4, 100

    root = jax.random.PRNGKey(0)
    k_emb, k_w, k_b, k_ids, k_drop = jax.random.split(root, 5)

    params = {
        "embedding":    jax.random.normal(k_emb, (VOCAB, H), dtype=jnp.float32) * 0.02,
        "classifier_w": jax.random.normal(k_w, (H, L), dtype=jnp.float32) * 0.02,
        "classifier_b": jax.random.normal(k_b, (1, L), dtype=jnp.float32) * 0.02,
    }

    input_ids = jax.random.randint(k_ids, (B, S), 0, VOCAB, dtype=jnp.int32)
    attention_mask = jnp.ones((B, S), dtype=jnp.int32)

    # Pure-JAX reference built from the same bf16 hidden states the kernel sees.
    hs_bf16 = jnp.take(params["embedding"], input_ids, axis=0).astype(jnp.bfloat16)
    pooled_ref = jnp.mean(hs_bf16.astype(jnp.float32), axis=1)

    # ---- eval mode (dropout = identity) ------------------------------------
    out_eval = forward(input_ids, attention_mask, params, k_drop, training=False)
    logits_eval = jax.block_until_ready(out_eval["logits"])
    ref_eval = pooled_ref @ params["classifier_w"] + params["classifier_b"]
    assert logits_eval.shape == (B, L)
    assert jnp.allclose(logits_eval, ref_eval, atol=1e-4, rtol=1e-4)

    # ---- train mode: verify in-kernel dropout against same-bits reference --
    out_train = forward(input_ids, attention_mask, params, k_drop, training=True)
    logits_train = jax.block_until_ready(out_train["logits"])
    bits_ref = jax.random.bits(k_drop, (B, H), dtype=jnp.uint32)
    keep_ref = bits_ref >= jnp.uint32(_DROP_THRESH)
    pooled_drop = jnp.where(keep_ref, pooled_ref * _KEEP_SCALE, 0.0)
    ref_train = pooled_drop @ params["classifier_w"] + params["classifier_b"]
    assert logits_train.shape == (B, L)
    assert jnp.allclose(logits_train, ref_train, atol=1e-4, rtol=1e-4)

    print("KERNEL_OK")
</pallas_src>

<mosaic_0001>
module attributes {stable_mosaic.version = 11 : i64} {
  func.func @_head_kernel(%arg0: i32, %arg1: i32, %arg2: memref<8x8x32xbf16, #tpu.memory_space<vmem>>, %arg3: memref<32x128xf32, #tpu.memory_space<vmem>>, %arg4: memref<1x128xf32, #tpu.memory_space<vmem>>, %arg5: memref<8x32xi32, #tpu.memory_space<vmem>>, %arg6: memref<8x128xf32, #tpu.memory_space<vmem>>, %arg7: memref<8x32xf32, #tpu.memory_space<vmem>>) attributes {dimension_semantics = [#tpu.dimension_semantics<parallel>, #tpu.dimension_semantics<arbitrary>], iteration_bounds = array<i64: 1, 1>, scalar_prefetch = 0 : i64, scratch_operands = 1 : i64, tpu.core_type = #tpu.core_type<tc>, window_params = [{transform_indices = @transform_0, window_bounds = array<i64: 8, 8, 32>}, {pipeline_mode = #tpu.pipeline_mode<synchronous>, transform_indices = @transform_1, window_bounds = array<i64: 32, 128>}, {pipeline_mode = #tpu.pipeline_mode<synchronous>, transform_indices = @transform_2, window_bounds = array<i64: 1, 128>}, {transform_indices = @transform_3, window_bounds = array<i64: 8, 32>}, {transform_indices = @transform_4, window_bounds = array<i64: 8, 128>}]} {
    %c0_i32 = arith.constant 0 : i32
    %0 = arith.cmpi eq, %arg1, %c0_i32 : i32
    %1 = arith.extui %0 : i1 to i32
    %c0_i32_0 = arith.constant 0 : i32
    %2 = arith.cmpi ne, %1, %c0_i32_0 : i32
    scf.if %2 {
      %cst_9 = arith.constant 0.000000e+00 : f32
      %12 = vector.broadcast %cst_9 : f32 to vector<8x32xf32>
      %c0_10 = arith.constant 0 : index
      %c0_11 = arith.constant 0 : index
      %13 = vector.load %arg7[%c0_10, %c0_11] : memref<8x32xf32, #tpu.memory_space<vmem>>, vector<8x32xf32>
      tpu.vector_store %arg7[%c0_10, %c0_11], %12 {strides = array<i32>} : memref<8x32xf32, #tpu.memory_space<vmem>>, vector<8x32xf32>,
    } else {
    }
    %c0 = arith.constant 0 : index
    %c0_1 = arith.constant 0 : index
    %3 = vector.load %arg7[%c0, %c0_1] : memref<8x32xf32, #tpu.memory_space<vmem>>, vector<8x32xf32>
    %c0_2 = arith.constant 0 : index
    %c0_3 = arith.constant 0 : index
    %c0_4 = arith.constant 0 : index
    %4 = vector.load %arg2[%c0_2, %c0_3, %c0_4] : memref<8x8x32xbf16, #tpu.memory_space<vmem>>, vector<8x8x32xbf16>
    %5 = arith.extf %4 : vector<8x8x32xbf16> to vector<8x8x32xf32>
    %cst = arith.constant dense<0.000000e+00> : vector<8x32xf32>
    %6 = vector.multi_reduction <add>, %5, %cst [1] : vector<8x8x32xf32> to vector<8x32xf32>
    %7 = arith.addf %3, %6 : vector<8x32xf32>
    %c0_5 = arith.constant 0 : index
    %c0_6 = arith.constant 0 : index
    %8 = vector.load %arg7[%c0_5, %c0_6] : memref<8x32xf32, #tpu.memory_space<vmem>>, vector<8x32xf32>
    tpu.vector_store %arg7[%c0_5, %c0_6], %7 {strides = array<i32>} : memref<8x32xf32, #tpu.memory_space<vmem>>, vector<8x32xf32>,
    %c0_i32_7 = arith.constant 0 : i32
    %9 = arith.cmpi eq, %arg1, %c0_i32_7 : i32
    %10 = arith.extui %9 : i1 to i32
    %c0_i32_8 = arith.constant 0 : i32
    %11 = arith.cmpi ne, %10, %c0_i32_8 : i32
    scf.if %11 {
      %c0_9 = arith.constant 0 : index
      %c0_10 = arith.constant 0 : index
      %12 = vector.load %arg7[%c0_9, %c0_10] : memref<8x32xf32, #tpu.memory_space<vmem>>, vector<8x32xf32>
      %c0_11 = arith.constant 0 : index
      %c0_12 = arith.constant 0 : index
      %13 = vector.load %arg3[%c0_11, %c0_12] : memref<32x128xf32, #tpu.memory_space<vmem>>, vector<32x128xf32>
      %cst_13 = arith.constant dense<0.000000e+00> : vector<8x128xf32>
      %14 = tpu.matmul %12, %13, %cst_13 {dimension_numbers = #tpu.dot_dimension_numbers<[1], [0], [0], [1], [0, 0, 1, 1], [], []>} : vector<8x32xf32>, vector<32x128xf32>, vector<8x128xf32> -> vector<8x128xf32>
      %c0_14 = arith.constant 0 : index
      %c0_15 = arith.constant 0 : index
      %15 = vector.load %arg4[%c0_14, %c0_15] : memref<1x128xf32, #tpu.memory_space<vmem>>, vector<1x128xf32>
      %16 = vector.broadcast %15 : vector<1x128xf32> to vector<8x128xf32>
      %17 = arith.addf %14, %16 : vector<8x128xf32>
      %c0_16 = arith.constant 0 : index
      %c0_17 = arith.constant 0 : index
      %18 = vector.load %arg6[%c0_16, %c0_17] : memref<8x128xf32, #tpu.memory_space<vmem>>, vector<8x128xf32>
      tpu.vector_store %arg6[%c0_16, %c0_17], %17 {strides = array<i32>} : memref<8x128xf32, #tpu.memory_space<vmem>>, vector<8x128xf32>,
    } else {
    }
    return
  }
  func.func @transform_0(%arg0: i32, %arg1: i32) -> (i32, i32, i32) {
    %c0_i32 = arith.constant 0 : i32
    %c0_i32_0 = arith.constant 0 : i32
    return %arg0, %arg1, %c0_i32 : i32, i32, i32
  }
  func.func @transform_1(%arg0: i32, %arg1: i32) -> (i32, i32) {
    %c0_i32 = arith.constant 0 : i32
    %c0_i32_0 = arith.constant 0 : i32
    %c0_i32_1 = arith.constant 0 : i32
    return %c0_i32, %c0_i32_0 : i32, i32
  }
  func.func @transform_2(%arg0: i32, %arg1: i32) -> (i32, i32) {
    %c0_i32 = arith.constant 0 : i32
    %c0_i32_0 = arith.constant 0 : i32
    %c0_i32_1 = arith.constant 0 : i32
    return %c0_i32, %c0_i32_0 : i32, i32
  }
  func.func @transform_3(%arg0: i32, %arg1: i32) -> (i32, i32) {
    %c0_i32 = arith.constant 0 : i32
    %c0_i32_0 = arith.constant 0 : i32
    return %arg0, %c0_i32 : i32, i32
  }
  func.func @transform_4(%arg0: i32, %arg1: i32) -> (i32, i32) {
    %c0_i32 = arith.constant 0 : i32
    %c0_i32_0 = arith.constant 0 : i32
    return %arg0, %c0_i32 : i32, i32
  }
}

</mosaic_0001>

<llo_original>
// kernel: tpu_custom_call.1
$region0: #{tpu_custom_call.1}
  #allocation0 [shape = 'u32[]', space=smem, size = 0x4, offset = 0x4, fixed_abs, tag = 'smem constant byte address 0x4 - core index']
  #allocation1 [shape = 'u32[72,128]{1,0:T(1,128)}', space=vmem, size = 0x9000, scoped, tag = 'internal scratch']
  #allocation2 [shape = 'f32[8,32]{1,0:T(8,128)}', space=vmem, size = 0x1000, scoped, tag = 'scratch operand']
  %s0 = inlined_call_operand.hbm [shape: bf16[8,8,32], index: 0, kind: input, shape index: {}]
  %s1 = inlined_call_operand.hbm [shape: f32[32,128], index: 1, kind: input, shape index: {}]
  %s2 = inlined_call_operand.vmem [shape: f32[1,128], index: 2, kind: input, shape index: {}]
  %s3 = inlined_call_operand.hbm [shape: u32[8,32], index: 3, kind: input, shape index: {}]
  %s4 = inlined_call_operand.hbm [shape: f32[8,128], index: 4, kind: output, shape index: {}]
  %s5 = sld [smem:[#allocation0]]
  $region46: #{tpu_custom_call.1} parent=0
    _
  %s7 = ssub.s32 1, %s5
  %s8 = scalar_select 0, %s7, %s5
  $region1: #{tpu_custom_call.1} parent=0
    #allocation3 [shape = 'u8[16384]{0}', space=vmem, size = 0x4000, scoped, tag = 'input window, operand 0, single buffered']
    #allocation4 [shape = 's32[1]{0}', space=sflag, size = 0x4, scoped, tag = 'scoped memory for tpu_custom_call.1']
    #allocation5 [shape = 's32[1]{0}', space=sflag, size = 0x4, scoped, tag = 'scoped memory for tpu_custom_call.1']
    #allocation6 [shape = 'u8[16384]{0}', space=vmem, size = 0x4000, scoped, tag = 'input window, operand 1, single buffered']
    #allocation7 [shape = 's32[1]{0}', space=sflag, size = 0x4, scoped, tag = 'scoped memory for tpu_custom_call.1']
    #allocation8 [shape = 'u8[4096]{0}', space=vmem, size = 0x1000, scoped, tag = 'input window, operand 3, single buffered']
    #allocation9 [shape = 'u8[4096]{0}', space=vmem, size = 0x1000, scoped, tag = 'output window, operand 0, single buffered']
    %9 = vsyncpa [#allocation4], 0
    %10 = vsyncpa [#allocation7], 0
    %11 = vsyncpa [#allocation5], 0
    // Predicated region
    $region2: #{tpu_custom_call.1} parent=1 // pred_check
      _
    $region3: #{tpu_custom_call.1} parent=1 // pred_check_branch
      %13 = sbr.rel (0) target = $region5
    $region4: #{tpu_custom_call.1} parent=1 // pred_region
      %15 = vsyncadd [#allocation4], 0
      %s16 = sshll.u32 %s0, 4
      %s17 = int_to_ptr.hbm [resolvable:$true] %s16
      %s18 = sshll.u32 [#allocation3], 4
      %s19 = int_to_ptr.vmem [resolvable:$true] %s18
      %24 = dma.hbm_to_vmem [thread:$0]  %s17, 512, %s19, [#allocation4], 64, 64, 4
    $region5: #{tpu_custom_call.1} parent=1 // pred_fallthru
      _
    // Predicated region
    $region6: #{tpu_custom_call.1} parent=1 // pred_check
      _
    $region7: #{tpu_custom_call.1} parent=1 // pred_check_branch
      %26 = sbr.rel (0) target = $region9
    $region8: #{tpu_custom_call.1} parent=1 // pred_region
      %28 = vsyncadd [#allocation7], 0
      %s29 = sshll.u32 %s1, 4
      %s30 = int_to_ptr.hbm [resolvable:$true] %s29
      %s31 = sshll.u32 [#allocation6], 4
      %s32 = int_to_ptr.vmem [resolvable:$true] %s31
      %37 = dma.hbm_to_vmem [thread:$0]  %s30, 512, %s32, [#allocation7], 128, 128, 8
    $region9: #{tpu_custom_call.1} parent=1 // pred_fallthru
      _
    // Predicated region
    $region10: #{tpu_custom_call.1} parent=1 // pred_check
      _
    $region11: #{tpu_custom_call.1} parent=1 // pred_check_branch
      %39 = sbr.rel (0) target = $region13
    $region12: #{tpu_custom_call.1} parent=1 // pred_region
      _
    $region13: #{tpu_custom_call.1} parent=1 // pred_fallthru
      _
    // Predicated region
    $region14: #{tpu_custom_call.1} parent=1 // pred_check
      _
    $region15: #{tpu_custom_call.1} parent=1 // pred_check_branch
      %41 = sbr.rel (0) target = $region17
    $region16: #{tpu_custom_call.1} parent=1 // pred_region
      %43 = vsyncadd [#allocation7], 0
      %s45 = sshll.u32 %s3, 4
      %s46 = int_to_ptr.hbm [resolvable:$true] %s45
      %s47 = sshll.u32 [#allocation8], 4
      %s48 = int_to_ptr.vmem [resolvable:$true] %s47
      %50 = dma.hbm_to_vmem [thread:$0]  %s46, 128, %s48, [#allocation7]
    $region17: #{tpu_custom_call.1} parent=1 // pred_fallthru
      _
    // Predicated region
    $region18: #{tpu_custom_call.1} parent=1 // pred_check
      _
    $region19: #{tpu_custom_call.1} parent=1 // pred_check_branch
      %52 = sbr.rel (0) target = $region21
    $region20: #{tpu_custom_call.1} parent=1 // pred_region
      %54 = dma.done [#allocation4], 512
    $region21: #{tpu_custom_call.1} parent=1 // pred_fallthru
      _
    // Predicated region
    $region22: #{tpu_custom_call.1} parent=1 // pred_check
      _
    $region23: #{tpu_custom_call.1} parent=1 // pred_check_branch
      %56 = sbr.rel (0) target = $region25
    $region24: #{tpu_custom_call.1} parent=1 // pred_region
      %58 = dma.done [#allocation7], 512
    $region25: #{tpu_custom_call.1} parent=1 // pred_fallthru
      _
    // Predicated region
    $region26: #{tpu_custom_call.1} parent=1 // pred_check
      _
    $region27: #{tpu_custom_call.1} parent=1 // pred_check_branch
      %60 = sbr.rel (0) target = $region29
    $region28: #{tpu_custom_call.1} parent=1 // pred_region
      %62 = dma.done [#allocation7], 128
    $region29: #{tpu_custom_call.1} parent=1 // pred_fallthru
      _
    %p63 = scmp.eq.s32.totalorder 0, 0
    // Predicated region
    $region30: #{tpu_custom_call.1} parent=1 // pred_check
      %p64 = pneg %p63
    $region31: #{tpu_custom_call.1} parent=1 // pred_check_branch
      %66 = sbr.rel (%p64) target = $region33
    $region32: #{tpu_custom_call.1} parent=1 // pred_region
      %vm67 = vcmask 261120
      %68 = vst.msk [vmem:[#allocation2] sm:$0xff] %vm67, 0.0
    $region33: #{tpu_custom_call.1} parent=1 // pred_fallthru
      _
    %v69 = vld [vmem:[#allocation2] sm:$0xff]
    %v70 = vld [vmem:[#allocation3] sm:$0xf]
    %v71 = vld [vmem:[#allocation3 + $0x4] sm:$0xf]
    %v72 = vld [vmem:[#allocation3 + $0x8] sm:$0xf]
    %v73 = vld [vmem:[#allocation3 + $0xc] sm:$0xf]
    %v74 = vld [vmem:[#allocation3 + $0x10] sm:$0xf]
    %v75 = vld [vmem:[#allocation3 + $0x14] sm:$0xf]
    %v76 = vld [vmem:[#allocation3 + $0x18] sm:$0xf]
    %v77 = vld [vmem:[#allocation3 + $0x1c] sm:$0xf]
    %v78 = vunpack.c.l.bf16 %v70
    %v79 = vunpack.c.l.bf16 %v71
    %v80 = vunpack.c.l.bf16 %v72
    %v81 = vunpack.c.l.bf16 %v73
    %v82 = vunpack.c.l.bf16 %v74
    %v83 = vunpack.c.l.bf16 %v75
    %v84 = vunpack.c.l.bf16 %v76
    %v85 = vunpack.c.l.bf16 %v77
    %vm86 = vcmask 261120
    %v87 = vsel %vm86, %v78, 0.0
    %v88 = vrot.slane %v87, 4
    %v89 = vadd.f32 %v87, %v88
    %v90 = vrot.slane %v89, 2
    %v91 = vadd.f32 %v89, %v90
    %v92 = vrot.slane %v91, 1
    %v93 = vadd.f32 %v91, %v92
    %v94 = vsel %vm86, %v79, 0.0
    %v95 = vrot.slane %v94, 4
    %v96 = vadd.f32 %v94, %v95
    %v97 = vrot.slane %v96, 2
    %v98 = vadd.f32 %v96, %v97
    %v99 = vrot.slane %v98, 1
    %v100 = vadd.f32 %v98, %v99
    %v101 = vsel %vm86, %v80, 0.0
    %v102 = vrot.slane %v101, 4
    %v103 = vadd.f32 %v101, %v102
    %v104 = vrot.slane %v103, 2
    %v105 = vadd.f32 %v103, %v104
    %v106 = vrot.slane %v105, 1
    %v107 = vadd.f32 %v105, %v106
    %v108 = vsel %vm86, %v81, 0.0
    %v109 = vrot.slane %v108, 4
    %v110 = vadd.f32 %v108, %v109
    %v111 = vrot.slane %v110, 2
    %v112 = vadd.f32 %v110, %v111
    %v113 = vrot.slane %v112, 1
    %v114 = vadd.f32 %v112, %v113
    %v115 = vsel %vm86, %v82, 0.0
    %v116 = vrot.slane %v115, 4
    %v117 = vadd.f32 %v115, %v116
    %v118 = vrot.slane %v117, 2
    %v119 = vadd.f32 %v117, %v118
    %v120 = vrot.slane %v119, 1
    %v121 = vadd.f32 %v119, %v120
    %v122 = vsel %vm86, %v83, 0.0
    %v123 = vrot.slane %v122, 4
    %v124 = vadd.f32 %v122, %v123
    %v125 = vrot.slane %v124, 2
    %v126 = vadd.f32 %v124, %v125
    %v127 = vrot.slane %v126, 1
    %v128 = vadd.f32 %v126, %v127
    %v129 = vsel %vm86, %v84, 0.0
    %v130 = vrot.slane %v129, 4
    %v131 = vadd.f32 %v129, %v130
    %v132 = vrot.slane %v131, 2
    %v133 = vadd.f32 %v131, %v132
    %v134 = vrot.slane %v133, 1
    %v135 = vadd.f32 %v133, %v134
    %v136 = vsel %vm86, %v85, 0.0
    %v137 = vrot.slane %v136, 4
    %v138 = vadd.f32 %v136, %v137
    %v139 = vrot.slane %v138, 2
    %v140 = vadd.f32 %v138, %v139
    %v141 = vrot.slane %v140, 1
    %v142 = vadd.f32 %v140, %v141
    %vm151 = vcmask 1041409
    %v152 = vsel %vm151, %v100, %v93
    %vm153 = vcmask 1042434
    %v154 = vsel %vm153, %v107, %v152
    %vm155 = vcmask 1043459
    %v156 = vsel %vm155, %v114, %v154
    %vm157 = vcmask 1044484
    %v158 = vsel %vm157, %v121, %v156
    %vm159 = vcmask 1045509
    %v160 = vsel %vm159, %v128, %v158
    %vm161 = vcmask 1046534
    %v162 = vsel %vm161, %v135, %v160
    %vm163 = vcmask 1047559
    %v164 = vsel %vm163, %v142, %v162
    %v166 = vadd.f32 %v69, %v164
    %167 = vst.msk [vmem:[#allocation2] sm:$0xff] %vm86, %v166
    // Predicated region
    $region34: #{tpu_custom_call.1} parent=1 // pred_check
      %p168 = pneg %p63
    $region35: #{tpu_custom_call.1} parent=1 // pred_check_branch
      %170 = sbr.rel (%p168) target = $region37
    $region36: #{tpu_custom_call.1} parent=1 // pred_region
      %v171 = vld [vmem:[#allocation2] sm:$0xff]
      %v172 = vld [vmem:[#allocation6] sm:$0xff]
      %v173 = vld [vmem:[#allocation6 + $0x8] sm:$0xff]
      %v174 = vld [vmem:[#allocation6 + $0x10] sm:$0xff]
      %v175 = vld [vmem:[#allocation6 + $0x18] sm:$0xff]
      %v176 = vld [vmem:[%s2] sm:$0x1]
      %v178 = vperm.slane %v176, 0
      %v181 = vsel %vm86, %v171, 0
      %183 = vmatpush.msra.mxu0 0.0
      %184 = vmatpush.msra.mxu0 0.0
      %185 = vmatpush.msra.mxu0 0.0
      %186 = vmatpush.msra.mxu0 0.0
      %187 = vmatpush.msra.mxu0 0.0
      %188 = vmatpush.msra.mxu0 0.0
      %189 = vmatpush.msra.mxu0 0.0
      %190 = vmatpush.msra.mxu0 0.0
      %191 = vmatpush.msra.mxu0 0.0
      %192 = vmatpush.msra.mxu0 0.0
      %193 = vmatpush.msra.mxu0 0.0
      %194 = vmatpush.msra.mxu0 0.0
      %195 = vmatpush.msra.mxu0 %v175
      %196 = vmatpush.msra.mxu0 %v174
      %197 = vmatpush.msra.mxu0 %v173
      %198 = vmatpush.msra.mxu0 %v172
      %199 = vmatmul.f32.gmra.mxu0 %v181
      %v200 = vpop.f32.mrf.mxu0
      %v201 = vadd.f32 %v178, %v200
      %202 = vdwg.mxu0
      %203 = vst [vmem:[#allocation9] sm:$0xff] %v201
    $region37: #{tpu_custom_call.1} parent=1 // pred_fallthru
      _
    // Predicated region
    $region38: #{tpu_custom_call.1} parent=1 // pred_check
      _
    $region39: #{tpu_custom_call.1} parent=1 // pred_check_branch
      %205 = sbr.rel (0) target = $region41
    $region40: #{tpu_custom_call.1} parent=1 // pred_region
      %207 = vsyncadd [#allocation5], 0
      %s209 = sshll.u32 [#allocation9], 4
      %s210 = int_to_ptr.vmem [resolvable:$true] %s209
      %s211 = sshll.u32 %s4, 4
      %s212 = int_to_ptr.hbm [resolvable:$true] %s211
      %214 = dma.vmem_to_hbm [thread:$0]  %s210, 128, %s212, [#allocation5]
    $region41: #{tpu_custom_call.1} parent=1 // pred_fallthru
      _
    // Predicated region
    $region42: #{tpu_custom_call.1} parent=1 // pred_check
      _
    $region43: #{tpu_custom_call.1} parent=1 // pred_check_branch
      %216 = sbr.rel (0) target = $region45
    $region44: #{tpu_custom_call.1} parent=1 // pred_region
      %218 = dma.done [#allocation5], 128
    $region45: #{tpu_custom_call.1} parent=1 // pred_fallthru
      _
    %219 = vsyncpa [#allocation4], 1
    %220 = vsyncpa [#allocation7], 1
    %221 = vsyncpa [#allocation5], 1

</llo_original>
